<compile_context>
chip_gen: v7x
topology: tpu7x:2x2x1
jax: 0.10.0
libtpu: 0.0.40
codegen_flags: <defaults>
</compile_context>

<pallas_src>
import functools

import jax
import jax.numpy as jnp
from jax.experimental import pallas as pl
from jax.experimental.pallas import tpu as pltpu


def _round_up(n: int, m: int) -> int:
    return ((n + m - 1) // m) * m


def rawnet_kernel(x_ref, w1_ref, b1_ref, w2_ref, b2_ref, w3_ref, b3_ref, o_ref):
    # Shapes (feature-major, Bt = batch tile on the lane axis):
    #   x:  (2, Bt)      w1: (H, 2)   b1: (H, 1)
    #   w2: (H, H)       b2: (H, 1)
    #   w3: (H, 1)       b3: (1, 1) in SMEM
    #   o:  (1, Bt)
    x = x_ref[...]
    w1 = w1_ref[...]

    # Layer 1: Linear(2 -> H) + tanh.  K=2 matmul -> two VPU broadcast FMAs
    # instead of a near-empty MXU pass.
    z1 = w1[:, 0:1] * x[0:1, :] + w1[:, 1:2] * x[1:2, :] + b1_ref[...]
    h1 = jnp.tanh(z1)                                            # (H, Bt)  EUP

    # Layer 2: Linear(H -> H) + tanh.  The only real matmul -> MXU, f32 accumulate.
    # TODO(synk): for large H, cast w2 to bf16 and/or add a K-tiling grid axis with
    # an f32 VMEM accumulator so w2 need not stay fully f32-resident.
    z2 = jnp.dot(w2_ref[...], h1, preferred_element_type=jnp.float32) + b2_ref[...]
    h2 = jnp.tanh(z2)                                            # (H, Bt)

    # Layer 3: Linear(H -> 1) + sigmoid.  Output width 1 -> elementwise multiply +
    # sublane (XLU) reduce instead of an MXU matmul.
    logits = jnp.sum(w3_ref[...] * h2, axis=0, keepdims=True) + b3_ref[0, 0]
    o_ref[...] = jax.nn.sigmoid(logits).astype(o_ref.dtype)      # (1, Bt)


@functools.partial(jax.jit, static_argnames=("block_b",))
def rawnet_forward(x, params, *, block_b=1024):
    """Forward pass of RawNet.

    x:      (B, 2) float32
    params: PyTorch nn.Linear layout — w1 (H,2), b1 (H,), w2 (H,H), b2 (H,),
            w3 (1,H), b3 (1,)
    returns (B, 1) float32
    """
    B = x.shape[0]
    H = params["w1"].shape[0]

    # ---- layout prep: cheap O(H) reshapes only (no per-call O(H^2) transposes) ----
    w1 = params["w1"].astype(jnp.float32)                 # (H, 2)
    b1 = params["b1"].reshape(H, 1).astype(jnp.float32)   # (H, 1)
    w2 = params["w2"].astype(jnp.float32)                 # (H, H)
    b2 = params["b2"].reshape(H, 1).astype(jnp.float32)   # (H, 1)
    w3 = params["w3"].reshape(H, 1).astype(jnp.float32)   # (H, 1)  (was (1, H))
    b3 = params["b3"].reshape(1, 1).astype(jnp.float32)   # (1, 1)  -> SMEM scalar

    # ---- batch tiling: batch lives on the 128-lane axis, padded to the tile ----
    bt = min(_round_up(max(block_b, 1), 128), _round_up(max(B, 1), 128))
    Bp = _round_up(max(B, 1), bt)                          # padded batch (lane-dense)

    xT = x.astype(jnp.float32).T                           # (2, B)
    if Bp != B:
        xT = jnp.pad(xT, ((0, 0), (0, Bp - B)))            # zero-pad only when needed

    grid = (Bp // bt,)

    out = pl.pallas_call(
        rawnet_kernel,
        out_shape=jax.ShapeDtypeStruct((1, Bp), jnp.float32),
        grid=grid,
        in_specs=[
            pl.BlockSpec((2, bt), lambda i: (0, i)),            # x tile (streams)
            pl.BlockSpec((H, 2), lambda i: (0, 0)),             # w1 (VMEM-resident)
            pl.BlockSpec((H, 1), lambda i: (0, 0)),             # b1 (VMEM-resident)
            pl.BlockSpec((H, H), lambda i: (0, 0)),             # w2 (VMEM-resident)
            pl.BlockSpec((H, 1), lambda i: (0, 0)),             # b2 (VMEM-resident)
            pl.BlockSpec((H, 1), lambda i: (0, 0)),             # w3 (VMEM-resident)
            pl.BlockSpec(memory_space=pltpu.MemorySpace.SMEM),  # b3 scalar in SMEM
        ],
        out_specs=pl.BlockSpec((1, bt), lambda i: (0, i)),
        compiler_params=pltpu.CompilerParams(
            # Independent batch axis -> shard grid steps across v7x's 2 TensorCores.
            dimension_semantics=("parallel",),
            # Explicit scoped-VMEM budget, safe on v5e/v6e (128 MiB) and v7x (64 MiB).
            vmem_limit_bytes=32 * 1024 * 1024,
        ),
    )(xT, w1, b1, w2, b2, w3, b3)

    return out[:, :B].T                                     # (B, 1)


def init_params(key, num_hid):
    """Deterministic init matching nn.Linear shapes (out, in) / (out,)."""
    k1, k2, k3, k4, k5, k6 = jax.random.split(key, 6)

    def uniform(k, shape, fan_in):
        bound = 1.0 / jnp.sqrt(fan_in)
        return jax.random.uniform(k, shape, jnp.float32, -bound, bound)

    return {
        "w1": uniform(k1, (num_hid, 2), 2.0),
        "b1": uniform(k2, (num_hid,), 2.0),
        "w2": uniform(k3, (num_hid, num_hid), float(num_hid)),
        "b2": uniform(k4, (num_hid,), float(num_hid)),
        "w3": uniform(k5, (1, num_hid), float(num_hid)),
        "b3": uniform(k6, (1,), float(num_hid)),
    }


def rawnet_reference(x, params):
    """Pure-JAX reference of the PyTorch forward pass (full-f32 matmuls)."""
    hp = jax.lax.Precision.HIGHEST
    h1 = jnp.tanh(jnp.dot(x, params["w1"].T, precision=hp) + params["b1"])
    h2 = jnp.tanh(jnp.dot(h1, params["w2"].T, precision=hp) + params["b2"])
    return jax.nn.sigmoid(jnp.dot(h2, params["w3"].T, precision=hp) + params["b3"])


if __name__ == "__main__":
    key = jax.random.PRNGKey(0)
    k_x, k_x2, k_p = jax.random.split(key, 3)

    num_hid = 32
    params = init_params(k_p, num_hid)

    # Small case (single grid step, lane padding 8 -> 128).
    x = jax.random.normal(k_x, (8, 2), jnp.float32)
    out = jax.block_until_ready(rawnet_forward(x, params))
    ref = rawnet_reference(x, params)
    assert out.shape == (8, 1)
    assert jnp.allclose(out, ref, atol=1e-5, rtol=1e-5), "mismatch vs reference (B=8)"

    # Ragged batch exercising lane padding + multiple pipelined grid steps.
    x2 = jax.random.normal(k_x2, (300, 2), jnp.float32)
    out2 = jax.block_until_ready(rawnet_forward(x2, params, block_b=128))
    ref2 = rawnet_reference(x2, params)
    assert out2.shape == (300, 1)
    assert jnp.allclose(out2, ref2, atol=1e-5, rtol=1e-5), "mismatch vs reference (B=300)"

    print("KERNEL_OK")
</pallas_src>

<mosaic_0001>
module attributes {stable_mosaic.version = 11 : i64} {
  func.func @rawnet_kernel(%arg0: i32, %arg1: memref<2x128xf32, #tpu.memory_space<vmem>>, %arg2: memref<32x2xf32, #tpu.memory_space<vmem>>, %arg3: memref<32x1xf32, #tpu.memory_space<vmem>>, %arg4: memref<32x32xf32, #tpu.memory_space<vmem>>, %arg5: memref<32x1xf32, #tpu.memory_space<vmem>>, %arg6: memref<32x1xf32, #tpu.memory_space<vmem>>, %arg7: memref<1x1xf32, #tpu.memory_space<smem>>, %arg8: memref<1x128xf32, #tpu.memory_space<vmem>>) attributes {dimension_semantics = [#tpu.dimension_semantics<parallel>], iteration_bounds = array<i64: 1>, scalar_prefetch = 0 : i64, scratch_operands = 0 : i64, tpu.core_type = #tpu.core_type<tc>, window_params = [{transform_indices = @transform_0, window_bounds = array<i64: 2, 128>}, {pipeline_mode = #tpu.pipeline_mode<synchronous>, transform_indices = @transform_1, window_bounds = array<i64: 32, 2>}, {pipeline_mode = #tpu.pipeline_mode<synchronous>, transform_indices = @transform_2, window_bounds = array<i64: 32, 1>}, {pipeline_mode = #tpu.pipeline_mode<synchronous>, transform_indices = @transform_3, window_bounds = array<i64: 32, 32>}, {pipeline_mode = #tpu.pipeline_mode<synchronous>, transform_indices = @transform_4, window_bounds = array<i64: 32, 1>}, {pipeline_mode = #tpu.pipeline_mode<synchronous>, transform_indices = @transform_5, window_bounds = array<i64: 32, 1>}, {transform_indices = @transform_6, window_bounds = array<i64: 1, 1>}, {transform_indices = @transform_7, window_bounds = array<i64: 1, 128>}]} {
    %c0 = arith.constant 0 : index
    %c0_0 = arith.constant 0 : index
    %0 = vector.load %arg1[%c0, %c0_0] : memref<2x128xf32, #tpu.memory_space<vmem>>, vector<2x128xf32>
    %c0_1 = arith.constant 0 : index
    %c0_2 = arith.constant 0 : index
    %1 = vector.load %arg2[%c0_1, %c0_2] : memref<32x2xf32, #tpu.memory_space<vmem>>, vector<32x2xf32>
    %2 = vector.extract_strided_slice %1 {offsets = [0, 0], sizes = [32, 1], strides = [1, 1]} : vector<32x2xf32> to vector<32x1xf32>
    %3 = vector.extract_strided_slice %0 {offsets = [0, 0], sizes = [1, 128], strides = [1, 1]} : vector<2x128xf32> to vector<1x128xf32>
    %4 = vector.broadcast %2 : vector<32x1xf32> to vector<32x128xf32>
    %5 = vector.broadcast %3 : vector<1x128xf32> to vector<32x128xf32>
    %6 = arith.mulf %4, %5 : vector<32x128xf32>
    %7 = vector.extract_strided_slice %1 {offsets = [0, 1], sizes = [32, 1], strides = [1, 1]} : vector<32x2xf32> to vector<32x1xf32>
    %8 = vector.extract_strided_slice %0 {offsets = [1, 0], sizes = [1, 128], strides = [1, 1]} : vector<2x128xf32> to vector<1x128xf32>
    %9 = vector.broadcast %7 : vector<32x1xf32> to vector<32x128xf32>
    %10 = vector.broadcast %8 : vector<1x128xf32> to vector<32x128xf32>
    %11 = arith.mulf %9, %10 : vector<32x128xf32>
    %12 = arith.addf %6, %11 : vector<32x128xf32>
    %c0_3 = arith.constant 0 : index
    %c0_4 = arith.constant 0 : index
    %13 = vector.load %arg3[%c0_3, %c0_4] : memref<32x1xf32, #tpu.memory_space<vmem>>, vector<32x1xf32>
    %14 = vector.broadcast %13 : vector<32x1xf32> to vector<32x128xf32>
    %15 = arith.addf %12, %14 : vector<32x128xf32>
    %16 = math.tanh %15 : vector<32x128xf32>
    %c0_5 = arith.constant 0 : index
    %c0_6 = arith.constant 0 : index
    %17 = vector.load %arg4[%c0_5, %c0_6] : memref<32x32xf32, #tpu.memory_space<vmem>>, vector<32x32xf32>
    %cst = arith.constant dense<0.000000e+00> : vector<32x128xf32>
    %18 = tpu.matmul %17, %16, %cst {dimension_numbers = #tpu.dot_dimension_numbers<[1], [0], [0], [1], [0, 0, 1, 1], [], []>} : vector<32x32xf32>, vector<32x128xf32>, vector<32x128xf32> -> vector<32x128xf32>
    %c0_7 = arith.constant 0 : index
    %c0_8 = arith.constant 0 : index
    %19 = vector.load %arg5[%c0_7, %c0_8] : memref<32x1xf32, #tpu.memory_space<vmem>>, vector<32x1xf32>
    %20 = vector.broadcast %19 : vector<32x1xf32> to vector<32x128xf32>
    %21 = arith.addf %18, %20 : vector<32x128xf32>
    %22 = math.tanh %21 : vector<32x128xf32>
    %c0_9 = arith.constant 0 : index
    %c0_10 = arith.constant 0 : index
    %23 = vector.load %arg6[%c0_9, %c0_10] : memref<32x1xf32, #tpu.memory_space<vmem>>, vector<32x1xf32>
    %24 = vector.broadcast %23 : vector<32x1xf32> to vector<32x128xf32>
    %25 = arith.mulf %24, %22 : vector<32x128xf32>
    %cst_11 = arith.constant dense<0.000000e+00> : vector<128xf32>
    %26 = vector.multi_reduction <add>, %25, %cst_11 [0] : vector<32x128xf32> to vector<128xf32>
    %27 = vector.shape_cast %26 : vector<128xf32> to vector<1x128xf32>
    %c0_12 = arith.constant 0 : index
    %c0_13 = arith.constant 0 : index
    %28 = memref.load %arg7[%c0_12, %c0_13] : memref<1x1xf32, #tpu.memory_space<smem>>
    %29 = vector.broadcast %28 : f32 to vector<1x128xf32>
    %30 = arith.addf %27, %29 : vector<1x128xf32>
    %31 = arith.negf %30 : vector<1x128xf32>
    %32 = math.exp %31 : vector<1x128xf32>
    %cst_14 = arith.constant 1.000000e+00 : f32
    %33 = vector.broadcast %cst_14 : f32 to vector<1x128xf32>
    %34 = arith.addf %33, %32 : vector<1x128xf32>
    %35 = arith.divf %33, %34 : vector<1x128xf32>
    %c0_15 = arith.constant 0 : index
    %c0_16 = arith.constant 0 : index
    %36 = vector.load %arg8[%c0_15, %c0_16] : memref<1x128xf32, #tpu.memory_space<vmem>>, vector<1x128xf32>
    tpu.vector_store %arg8[%c0_15, %c0_16], %35 {strides = array<i32>} : memref<1x128xf32, #tpu.memory_space<vmem>>, vector<1x128xf32>,
    return
  }
  func.func @transform_0(%arg0: i32) -> (i32, i32) {
    %c0_i32 = arith.constant 0 : i32
    %c0_i32_0 = arith.constant 0 : i32
    return %c0_i32, %arg0 : i32, i32
  }
  func.func @transform_1(%arg0: i32) -> (i32, i32) {
    %c0_i32 = arith.constant 0 : i32
    %c0_i32_0 = arith.constant 0 : i32
    %c0_i32_1 = arith.constant 0 : i32
    return %c0_i32, %c0_i32_0 : i32, i32
  }
  func.func @transform_2(%arg0: i32) -> (i32, i32) {
    %c0_i32 = arith.constant 0 : i32
    %c0_i32_0 = arith.constant 0 : i32
    %c0_i32_1 = arith.constant 0 : i32
    return %c0_i32, %c0_i32_0 : i32, i32
  }
  func.func @transform_3(%arg0: i32) -> (i32, i32) {
    %c0_i32 = arith.constant 0 : i32
    %c0_i32_0 = arith.constant 0 : i32
    %c0_i32_1 = arith.constant 0 : i32
    return %c0_i32, %c0_i32_0 : i32, i32
  }
  func.func @transform_4(%arg0: i32) -> (i32, i32) {
    %c0_i32 = arith.constant 0 : i32
    %c0_i32_0 = arith.constant 0 : i32
    %c0_i32_1 = arith.constant 0 : i32
    return %c0_i32, %c0_i32_0 : i32, i32
  }
  func.func @transform_5(%arg0: i32) -> (i32, i32) {
    %c0_i32 = arith.constant 0 : i32
    %c0_i32_0 = arith.constant 0 : i32
    %c0_i32_1 = arith.constant 0 : i32
    return %c0_i32, %c0_i32_0 : i32, i32
  }
  func.func @transform_6(%arg0: i32) -> (i32, i32) {
    %c0_i32 = arith.constant 0 : i32
    %c0_i32_0 = arith.constant 0 : i32
    %c0_i32_1 = arith.constant 0 : i32
    return %c0_i32, %c0_i32_0 : i32, i32
  }
  func.func @transform_7(%arg0: i32) -> (i32, i32) {
    %c0_i32 = arith.constant 0 : i32
    %c0_i32_0 = arith.constant 0 : i32
    return %c0_i32, %arg0 : i32, i32
  }
}

</mosaic_0001>

<llo_original>
// kernel: rawnet_forward.1
$region0: #{rawnet_forward.1}
  #allocation0 [shape = 'u32[]', space=smem, size = 0x4, offset = 0x4, fixed_abs, tag = 'smem constant byte address 0x4 - core index']
  #allocation1 [shape = 'u32[144,128]{1,0:T(1,128)}', space=vmem, size = 0x12000, scoped, tag = 'internal scratch']
  #allocation2 [shape = 'f32[1,1]{1,0:T(1,128)S(6)}', space=smem, size = 0x200, scoped, tag = 'scoped memory for rawnet_forward.1']
  %s0 = inlined_call_operand.vmem [shape: f32[2,128], index: 0, kind: input, shape index: {}]
  %s1 = inlined_call_operand.vmem [shape: f32[32,2], index: 1, kind: input, shape index: {}]
  %s2 = inlined_call_operand.vmem [shape: f32[32,1], index: 2, kind: input, shape index: {}]
  %s3 = inlined_call_operand.vmem [shape: f32[32,32], index: 3, kind: input, shape index: {}]
  %s4 = inlined_call_operand.vmem [shape: f32[32,1], index: 4, kind: input, shape index: {}]
  %s5 = inlined_call_operand.vmem [shape: f32[32,1], index: 5, kind: input, shape index: {}]
  %s6 = inlined_call_operand.<no memory space> [shape: f32[1,1], index: 6, kind: input, shape index: {}]
  %s7 = inlined_call_operand.vmem [shape: f32[1,128], index: 7, kind: output, shape index: {}]
  %s8 = sld [smem:[#allocation0]]
  $region38: #{rawnet_forward.1} parent=0
    _
  %s10 = ssub.s32 1, %s8
  %s11 = scalar_select 0, %s10, %s8
  %12 = sst [smem:[#allocation2]] %s6
  // Predicated region
  $region2: #{rawnet_forward.1} parent=0 // pred_check
    _
  $region3: #{rawnet_forward.1} parent=0 // pred_check_branch
    %14 = sbr.rel (0) target = $region5
  $region4: #{rawnet_forward.1} parent=0 // pred_region
    _
  $region5: #{rawnet_forward.1} parent=0 // pred_fallthru
    _
  // Predicated region
  $region6: #{rawnet_forward.1} parent=0 // pred_check
    _
  $region7: #{rawnet_forward.1} parent=0 // pred_check_branch
    %16 = sbr.rel (0) target = $region9
  $region8: #{rawnet_forward.1} parent=0 // pred_region
    _
  $region9: #{rawnet_forward.1} parent=0 // pred_fallthru
    _
  // Predicated region
  $region10: #{rawnet_forward.1} parent=0 // pred_check
    _
  $region11: #{rawnet_forward.1} parent=0 // pred_check_branch
    %18 = sbr.rel (0) target = $region13
  $region12: #{rawnet_forward.1} parent=0 // pred_region
    _
  $region13: #{rawnet_forward.1} parent=0 // pred_fallthru
    _
  // Predicated region
  $region14: #{rawnet_forward.1} parent=0 // pred_check
    _
  $region15: #{rawnet_forward.1} parent=0 // pred_check_branch
    %20 = sbr.rel (0) target = $region17
  $region16: #{rawnet_forward.1} parent=0 // pred_region
    _
  $region17: #{rawnet_forward.1} parent=0 // pred_fallthru
    _
  // Predicated region
  $region18: #{rawnet_forward.1} parent=0 // pred_check
    _
  $region19: #{rawnet_forward.1} parent=0 // pred_check_branch
    %22 = sbr.rel (0) target = $region21
  $region20: #{rawnet_forward.1} parent=0 // pred_region
    _
  $region21: #{rawnet_forward.1} parent=0 // pred_fallthru
    _
  // Predicated region
  $region22: #{rawnet_forward.1} parent=0 // pred_check
    _
  $region23: #{rawnet_forward.1} parent=0 // pred_check_branch
    %24 = sbr.rel (0) target = $region25
  $region24: #{rawnet_forward.1} parent=0 // pred_region
    _
  $region25: #{rawnet_forward.1} parent=0 // pred_fallthru
    _
  // Predicated region
  $region26: #{rawnet_forward.1} parent=0 // pred_check
    _
  $region27: #{rawnet_forward.1} parent=0 // pred_check_branch
    %26 = sbr.rel (0) target = $region29
  $region28: #{rawnet_forward.1} parent=0 // pred_region
    _
  $region29: #{rawnet_forward.1} parent=0 // pred_fallthru
    _
  %v27 = vld [vmem:[%s0] sm:$0x3]
  %v28 = vld [vmem:[%s1] sm:$0xff]
  %v29 = vld [vmem:[%s1 + $0x8] sm:$0xff]
  %v30 = vld [vmem:[%s1 + $0x10] sm:$0xff]
  %v31 = vld [vmem:[%s1 + $0x18] sm:$0xff]
  %33 = vset.pattern.permute.xlu0 0
  %34 = vperm.xlu0 %33, %v28
  %v35 = vpop.permute.xlu0 %34
  %38 = vset.pattern.permute.xlu0 0
  %39 = vperm.xlu0 %38, %v29
  %v40 = vpop.permute.xlu0 %39
  %43 = vset.pattern.permute.xlu0 0
  %44 = vperm.xlu0 %43, %v30
  %v45 = vpop.permute.xlu0 %44
  %48 = vset.pattern.permute.xlu0 0
  %49 = vperm.xlu0 %48, %v31
  %v50 = vpop.permute.xlu0 %49
  %v52 = vlaneseq
  %v53 = vshrl.u32 %v52, 7
  %v54 = vsub.s32 0, %v53
  %v55 = vrot.slane %v27, %v54
  %v56 = vmul.f32 %v35, %v55
  %v57 = vmul.f32 %v40, %v55
  %v58 = vmul.f32 %v45, %v55
  %v59 = vmul.f32 %v50, %v55
  %60 = vset.pattern.permute.xlu0 1
  %61 = vperm.xlu0 %60, %v28
  %v62 = vpop.permute.xlu0 %61
  %64 = vset.pattern.permute.xlu0 1
  %65 = vperm.xlu0 %64, %v29
  %v66 = vpop.permute.xlu0 %65
  %68 = vset.pattern.permute.xlu0 1
  %69 = vperm.xlu0 %68, %v30
  %v70 = vpop.permute.xlu0 %69
  %72 = vset.pattern.permute.xlu0 1
  %73 = vperm.xlu0 %72, %v31
  %v74 = vpop.permute.xlu0 %73
  %v76 = vlaneseq
  %v77 = vshrl.u32 %v76, 7
  %v78 = vsub.s32 1, %v77
  %v79 = vrot.slane %v27, %v78
  %v80 = vmul.f32 %v62, %v79
  %v81 = vmul.f32 %v66, %v79
  %v82 = vmul.f32 %v70, %v79
  %v83 = vmul.f32 %v74, %v79
  %v84 = vadd.f32 %v56, %v80
  %v85 = vadd.f32 %v57, %v81
  %v86 = vadd.f32 %v58, %v82
  %v87 = vadd.f32 %v59, %v83
  %v88 = vld [vmem:[%s2] sm:$0xff]
  %v89 = vld [vmem:[%s2 + $0x8] sm:$0xff]
  %v90 = vld [vmem:[%s2 + $0x10] sm:$0xff]
  %v91 = vld [vmem:[%s2 + $0x18] sm:$0xff]
  %93 = vset.pattern.permute.xlu0 0
  %94 = vperm.xlu0 %93, %v88
  %v95 = vpop.permute.xlu0 %94
  %98 = vset.pattern.permute.xlu0 0
  %99 = vperm.xlu0 %98, %v89
  %v100 = vpop.permute.xlu0 %99
  %103 = vset.pattern.permute.xlu0 0
  %104 = vperm.xlu0 %103, %v90
  %v105 = vpop.permute.xlu0 %104
  %108 = vset.pattern.permute.xlu0 0
  %109 = vperm.xlu0 %108, %v91
  %v110 = vpop.permute.xlu0 %109
  %v112 = vadd.f32 %v84, %v95
  %v113 = vadd.f32 %v85, %v100
  %v114 = vadd.f32 %v86, %v105
  %v115 = vadd.f32 %v87, %v110
  %v116 = vtanh.pop %v112
  %v117 = vtanh.pop %v113
  %v118 = vtanh.pop %v114
  %v119 = vtanh.pop %v115
  %v120 = vld [vmem:[%s3] sm:$0xff]
  %v121 = vld [vmem:[%s3 + $0x8] sm:$0xff]
  %v122 = vld [vmem:[%s3 + $0x10] sm:$0xff]
  %v123 = vld [vmem:[%s3 + $0x18] sm:$0xff]
  %v124 = vld [vmem:[%s4] sm:$0xff]
  %v125 = vld [vmem:[%s4 + $0x8] sm:$0xff]
  %v126 = vld [vmem:[%s4 + $0x10] sm:$0xff]
  %v127 = vld [vmem:[%s4 + $0x18] sm:$0xff]
  %129 = vset.pattern.permute.xlu0 0
  %130 = vperm.xlu0 %129, %v124
  %v131 = vpop.permute.xlu0 %130
  %134 = vset.pattern.permute.xlu0 0
  %135 = vperm.xlu0 %134, %v125
  %v136 = vpop.permute.xlu0 %135
  %139 = vset.pattern.permute.xlu0 0
  %140 = vperm.xlu0 %139, %v126
  %v141 = vpop.permute.xlu0 %140
  %144 = vset.pattern.permute.xlu0 0
  %145 = vperm.xlu0 %144, %v127
  %v146 = vpop.permute.xlu0 %145
  %vm148 = vcmask 261120
  %v150 = vsel %vm148, %v120, 0
  %v153 = vsel %vm148, %v121, 0
  %v156 = vsel %vm148, %v122, 0
  %v159 = vsel %vm148, %v123, 0
  %161 = vmatprep.subr.mxu0 0.0
  %162 = vmatpush1.msra.mxu0 %v116
  %163 = vmatprep.subr.mxu0 0.0
  %164 = vmatpush1.msra.mxu0 %v117
  %165 = vmatprep.subr.mxu0 0.0
  %166 = vmatpush1.msra.mxu0 %v118
  %167 = vmatprep.subr.mxu0 0.0
  %168 = vmatpush1.msra.mxu0 %v119
  %169 = vmatprep.subr.mxu0 0.0
  %170 = vmatpush1.msra.mxu0 0.0
  %171 = vmatprep.subr.mxu0 0.0
  %172 = vmatpush1.msra.mxu0 0.0
  %173 = vmatprep.subr.mxu0 0.0
  %174 = vmatpush1.msra.mxu0 0.0
  %175 = vmatprep.subr.mxu0 0.0
  %176 = vmatpush1.msra.mxu0 0.0
  %177 = vmatprep.subr.mxu0 0.0
  %178 = vmatpush1.msra.mxu0 0.0
  %179 = vmatprep.subr.mxu0 0.0
  %180 = vmatpush1.msra.mxu0 0.0
  %181 = vmatprep.subr.mxu0 0.0
  %182 = vmatpush1.msra.mxu0 0.0
  %183 = vmatprep.subr.mxu0 0.0
  %184 = vmatpush1.msra.mxu0 0.0
  %185 = vmatprep.subr.mxu0 0.0
  %186 = vmatpush1.msra.mxu0 0.0
  %187 = vmatprep.subr.mxu0 0.0
  %188 = vmatpush1.msra.mxu0 0.0
  %189 = vmatprep.subr.mxu0 0.0
  %190 = vmatpush1.msra.mxu0 0.0
  %191 = vmatprep.subr.mxu0 0.0
  %192 = vmatpush1.msra.mxu0 0.0
  %193 = vmatprep.subr.mxu0 0.0
  %194 = vmatpush1.msra.mxu0 0.0
  %195 = vmatprep.subr.mxu0 0.0
  %196 = vmatpush1.msra.mxu0 0.0
  %197 = vmatprep.subr.mxu0 0.0
  %198 = vmatpush1.msra.mxu0 0.0
  %199 = vmatprep.subr.mxu0 0.0
  %200 = vmatpush1.msra.mxu0 0.0
  %201 = vmatprep.subr.mxu0 0.0
  %202 = vmatpush1.msra.mxu0 0.0
  %203 = vmatprep.subr.mxu0 0.0
  %204 = vmatpush1.msra.mxu0 0.0
  %205 = vmatprep.subr.mxu0 0.0
  %206 = vmatpush1.msra.mxu0 0.0
  %207 = vmatprep.subr.mxu0 0.0
  %208 = vmatpush1.msra.mxu0 0.0
  %209 = vmatprep.subr.mxu0 0.0
  %210 = vmatpush1.msra.mxu0 0.0
  %211 = vmatprep.subr.mxu0 0.0
  %212 = vmatpush1.msra.mxu0 0.0
  %213 = vmatprep.subr.mxu0 0.0
  %214 = vmatpush1.msra.mxu0 0.0
  %215 = vmatprep.subr.mxu0 0.0
  %216 = vmatpush1.msra.mxu0 0.0
  %217 = vmatprep.subr.mxu0 0.0
  %218 = vmatpush1.msra.mxu0 0.0
  %219 = vmatprep.subr.mxu0 0.0
  %220 = vmatpush1.msra.mxu0 0.0
  %221 = vmatprep.subr.mxu0 0.0
  %222 = vmatpush1.msra.mxu0 0.0
  %223 = vmatprep.subr.mxu0 0.0
  %224 = vmatpush1.msra.mxu0 0.0
  %225 = vmatprep.mubr.f32.mxu0 0.0
  %226 = vmatmul.mubr.f32.gmra.mrb[0].mxu0 %v150
  %v227 = vpop.f32.mrb[0].mxu0
  %v228 = vadd.f32 %v131, %v227
  %v229 = vpop.f32.mrb[0].mxu0
  %230 = vmatprep.mubr.f32.mxu0 0.0
  %231 = vmatmul.mubr.f32.gmra.mrb[0].mxu0 %v153
  %v232 = vpop.f32.mrb[0].mxu0
  %v233 = vadd.f32 %v136, %v232
  %v234 = vpop.f32.mrb[0].mxu0
  %235 = vmatprep.mubr.f32.mxu0 0.0
  %236 = vmatmul.mubr.f32.gmra.mrb[0].mxu0 %v156
  %v237 = vpop.f32.mrb[0].mxu0
  %v238 = vadd.f32 %v141, %v237
  %v239 = vpop.f32.mrb[0].mxu0
  %240 = vmatprep.mubr.f32.mxu0 0.0
  %241 = vmatmul.mubr.f32.gmra.mrb[0].mxu0 %v159
  %v242 = vpop.f32.mrb[0].mxu0
  %v243 = vadd.f32 %v146, %v242
  %v244 = vpop.f32.mrb[0].mxu0
  %245 = vdwg.mxu0
  %v246 = vtanh.pop %v228
  %v247 = vtanh.pop %v233
  %v248 = vtanh.pop %v238
  %v249 = vtanh.pop %v243
  %v250 = vld [vmem:[%s5] sm:$0xff]
  %v251 = vld [vmem:[%s5 + $0x8] sm:$0xff]
  %v252 = vld [vmem:[%s5 + $0x10] sm:$0xff]
  %v253 = vld [vmem:[%s5 + $0x18] sm:$0xff]
  %255 = vset.pattern.permute.xlu0 0
  %256 = vperm.xlu0 %255, %v250
  %v257 = vpop.permute.xlu0 %256
  %260 = vset.pattern.permute.xlu0 0
  %261 = vperm.xlu0 %260, %v251
  %v262 = vpop.permute.xlu0 %261
  %265 = vset.pattern.permute.xlu0 0
  %266 = vperm.xlu0 %265, %v252
  %v267 = vpop.permute.xlu0 %266
  %270 = vset.pattern.permute.xlu0 0
  %271 = vperm.xlu0 %270, %v253
  %v272 = vpop.permute.xlu0 %271
  %v274 = vmul.f32 %v257, %v246
  %v275 = vmul.f32 %v262, %v247
  %v276 = vmul.f32 %v267, %v248
  %v277 = vmul.f32 %v272, %v249
  %v278 = vadd.f32 %v274, %v275
  %v279 = vadd.f32 %v278, %v276
  %v280 = vadd.f32 %v279, %v277
  %v281 = vrot.slane %v280, 4
  %v282 = vadd.f32 %v280, %v281
  %v283 = vrot.slane %v282, 2
  %v284 = vadd.f32 %v282, %v283
  %v285 = vrot.slane %v284, 1
  %v286 = vadd.f32 %v284, %v285
  %s287 = sld [smem:[#allocation2]]
  %v288 = vstv %s287
  %v289 = vadd.f32 %v286, %v288
  %v290 = vxor.u32 %v289, 2147483648
  %v291 = vmul.f32 %v290, 1.442695
  %v292 = vpow.pop %v291
  %v293 = vadd.f32 %v292, 1.0
  %v294 = vrcp.pop %v293
  %v295 = vmul.f32 1.0, %v294
  %296 = vst [vmem:[%s7] sm:$0x1] %v295
  // Predicated region
  $region30: #{rawnet_forward.1} parent=0 // pred_check
    _
  $region31: #{rawnet_forward.1} parent=0 // pred_check_branch
    %298 = sbr.rel (0) target = $region33
  $region32: #{rawnet_forward.1} parent=0 // pred_region
    _
  $region33: #{rawnet_forward.1} parent=0 // pred_fallthru
    _
  // Predicated region
  $region34: #{rawnet_forward.1} parent=0 // pred_check
    _
  $region35: #{rawnet_forward.1} parent=0 // pred_check_branch
    %300 = sbr.rel (0) target = $region37
  $region36: #{rawnet_forward.1} parent=0 // pred_region
    _
  $region37: #{rawnet_forward.1} parent=0 // pred_fallthru
    _

</llo_original>
